<compile_context>
chip_gen: v6e
topology: v6e:2x2x1
jax: 0.10.0
libtpu: 0.0.40
codegen_flags: <defaults>
</compile_context>

<pallas_src>
import jax
import jax.numpy as jnp
from jax import lax
from jax.experimental import pallas as pl
from jax.experimental.pallas import tpu as pltpu
import numpy as np


def _round_up(n, m):
    return ((n + m - 1) // m) * m


def _pad2(a, shape):
    pads = [(0, s - d) for s, d in zip(shape, a.shape)]
    if any(p[1] for p in pads):
        a = jnp.pad(a, pads)
    return a


def _pick_tile(n_pad, target):
    """Largest multiple of 128 that divides n_pad and is <= target."""
    best = 128
    t = 128
    while t <= min(n_pad, target):
        if n_pad % t == 0:
            best = t
        t += 128
    return best


# ---------------- stage 0: h = x @ W (tiny projection, row-tiled) ----------------

def h_kernel(x_ref, w_ref, h_ref):
    h_ref[...] = jnp.dot(x_ref[...], w_ref[...],
                         preferred_element_type=jnp.float32).astype(jnp.bfloat16)


# -------- stage 1: z = A_scaled @ h + bias (reduction over source-node tiles) --------

def z_kernel(a_ref, h_ref, b_ref, z_ref, zb_ref, acc_ref):
    k = pl.program_id(1)

    @pl.when(k == 0)
    def _():
        acc_ref[...] = jnp.zeros_like(acc_ref)

    acc_ref[...] += jnp.dot(a_ref[...], h_ref[...],
                            preferred_element_type=jnp.float32)

    @pl.when(k == pl.num_programs(1) - 1)
    def _():
        z = acc_ref[...] + b_ref[...]
        z_ref[...] = z
        zb_ref[...] = z.astype(jnp.bfloat16)


# ---------- stage 2: adj_rec = z @ z.T without materializing the transpose ----------

def dec_kernel(zi_ref, zj_ref, o_ref):
    o_ref[...] = lax.dot_general(
        zi_ref[...], zj_ref[...],
        dimension_numbers=(((1,), (1,)), ((), ())),
        preferred_element_type=jnp.float32)


def gcnae_alpha_forward(x, W, bias, A_scaled, tm=256, tn=256, tk=512,
                        vmem_limit_bytes=32 * 1024 * 1024):
    """x: (N, F) f32, W: (F, H) f32, bias: (1, H) f32,
    A_scaled: (N, N) f32 alpha-weighted, degree-normalized adjacency (dst, src)."""
    N, F = x.shape
    H = W.shape[1]
    n_pad = _round_up(N, 128)
    f_pad = _round_up(F, 128)
    h_pad = _round_up(H, 128)

    x_p = _pad2(x.astype(jnp.float32), (n_pad, f_pad))
    w_p = _pad2(W.astype(jnp.float32), (f_pad, h_pad))
    b_p = _pad2(bias.astype(jnp.float32).reshape(1, H), (1, h_pad))
    a_p = _pad2(A_scaled.astype(jnp.float32), (n_pad, n_pad)).astype(jnp.bfloat16)

    TM = _pick_tile(n_pad, tm)
    TN = _pick_tile(n_pad, tn)
    TK = _pick_tile(n_pad, tk)

    # ---- stage 0: h = x @ W -> bf16 (n_pad, h_pad), kept in HBM (tiny) ----
    h_bf16 = pl.pallas_call(
        h_kernel,
        out_shape=jax.ShapeDtypeStruct((n_pad, h_pad), jnp.bfloat16),
        grid_spec=pltpu.PrefetchScalarGridSpec(
            num_scalar_prefetch=0,
            grid=(n_pad // TM,),
            in_specs=[pl.BlockSpec((TM, f_pad), lambda i: (i, 0)),
                      pl.BlockSpec((f_pad, h_pad), lambda i: (0, 0))],
            out_specs=pl.BlockSpec((TM, h_pad), lambda i: (i, 0))),
        compiler_params=pltpu.CompilerParams(
            dimension_semantics=("parallel",),
            vmem_limit_bytes=vmem_limit_bytes),
    )(x_p, w_p)

    # ---- stage 1: z = A_scaled @ h + bias, accumulated over source tiles ----
    z_f32, z_bf16 = pl.pallas_call(
        z_kernel,
        out_shape=(jax.ShapeDtypeStruct((n_pad, h_pad), jnp.float32),
                   jax.ShapeDtypeStruct((n_pad, h_pad), jnp.bfloat16)),
        grid_spec=pltpu.PrefetchScalarGridSpec(
            num_scalar_prefetch=0,
            grid=(n_pad // TM, n_pad // TK),
            in_specs=[pl.BlockSpec((TM, TK), lambda i, k: (i, k)),      # A_scaled (bf16)
                      pl.BlockSpec((TK, h_pad), lambda i, k: (k, 0)),   # h (bf16)
                      pl.BlockSpec((1, h_pad), lambda i, k: (0, 0))],   # bias (f32)
            out_specs=[pl.BlockSpec((TM, h_pad), lambda i, k: (i, 0)),
                       pl.BlockSpec((TM, h_pad), lambda i, k: (i, 0))],
            scratch_shapes=[pltpu.VMEM((TM, h_pad), jnp.float32)]),
        compiler_params=pltpu.CompilerParams(
            dimension_semantics=("parallel", "arbitrary"),
            vmem_limit_bytes=vmem_limit_bytes),
    )(a_p, h_bf16, b_p)

    # ---- stage 2: adj_rec = z @ z.T, lane-dense (TM, TN) f32 output tiles ----
    adj = pl.pallas_call(
        dec_kernel,
        out_shape=jax.ShapeDtypeStruct((n_pad, n_pad), jnp.float32),
        grid_spec=pltpu.PrefetchScalarGridSpec(
            num_scalar_prefetch=0,
            grid=(n_pad // TM, n_pad // TN),
            in_specs=[pl.BlockSpec((TM, h_pad), lambda i, j: (i, 0)),
                      pl.BlockSpec((TN, h_pad), lambda i, j: (j, 0))],
            out_specs=pl.BlockSpec((TM, TN), lambda i, j: (i, j))),
        compiler_params=pltpu.CompilerParams(
            dimension_semantics=("parallel", "parallel"),
            vmem_limit_bytes=vmem_limit_bytes),
    )(z_bf16, z_bf16)

    return adj[:N, :N], z_f32[:N, :H]


def build_scaled_alpha_adjacency(edge_src, edge_dst, node_ids, alpha, gene_num, N):
    """Plain-JAX glue: edge list + alpha parameter -> dense alpha-weighted
    adjacency (dst, src) with both degree normalizations folded in."""
    src_id = node_ids[edge_src]
    dst_id = node_ids[edge_dst]
    # edge_selection_simple index logic
    idx = jnp.full(edge_src.shape, gene_num + 1, dtype=jnp.int32)
    idx = jnp.where((src_id >= 0) & (dst_id < 0), src_id, idx)
    idx = jnp.where((dst_id >= 0) & (src_id < 0), dst_id, idx)
    idx = jnp.where((dst_id >= 0) & (src_id >= 0), gene_num, idx)
    w = alpha[idx, 0]                                              # (E,)
    A = jnp.zeros((N, N), jnp.float32).at[edge_dst, edge_src].add(w)
    E = jnp.zeros((N, N), jnp.float32).at[edge_dst, edge_src].add(1.0)
    out_deg = jnp.maximum(E.sum(axis=0), 1.0)   # out-degree of each src node
    in_deg = jnp.maximum(E.sum(axis=1), 1.0)    # in-degree of each dst node
    out_norm = out_deg ** -0.5
    in_norm = in_deg ** -0.5
    return in_norm[:, None] * A * out_norm[None, :]


if __name__ == "__main__":
    # Small synthetic problem (single graph block, src set == dst set).
    N = 520          # total nodes (pads to 640 -> multi-tile grids)
    in_feats = 48
    n_hidden = 16
    gene_num = 400   # nodes 0..399 are genes (id == position), rest are cells (id = -1)
    num_edges = 4096

    key = jax.random.PRNGKey(0)
    k_feat, k_w, k_b, k_src, k_dst = jax.random.split(key, 5)

    # Node features
    x = jax.random.normal(k_feat, (N, in_feats), dtype=jnp.float32)

    # Node ids: genes carry their gene index, cells carry -1 (scDeepSort convention)
    node_ids = jnp.concatenate([
        jnp.arange(gene_num, dtype=jnp.int32),
        jnp.full((N - gene_num,), -1, dtype=jnp.int32),
    ])

    # Random edge list (src -> dst)
    edge_src = jax.random.randint(k_src, (num_edges,), 0, N, dtype=jnp.int32)
    edge_dst = jax.random.randint(k_dst, (num_edges,), 0, N, dtype=jnp.int32)

    # Parameters (shapes from GCNAEAlpha.__init__):
    #   alpha: (gene_num + 2, 1) initialized to ones; layer1 weight xavier-like; bias small
    alpha = jnp.ones((gene_num + 2, 1), dtype=jnp.float32)
    limit = float(np.sqrt(6.0 / (in_feats + n_hidden)))
    W = jax.random.uniform(k_w, (in_feats, n_hidden), dtype=jnp.float32,
                           minval=-limit, maxval=limit)
    bias = 0.01 * jax.random.normal(k_b, (1, n_hidden), dtype=jnp.float32)

    # Build alpha-weighted, degree-normalized dense adjacency (glue, plain JAX)
    A_scaled = build_scaled_alpha_adjacency(edge_src, edge_dst, node_ids,
                                            alpha, gene_num, N)

    # Run the Pallas kernels
    adj_rec, z = gcnae_alpha_forward(x, W, bias, A_scaled)
    jax.block_until_ready((adj_rec, z))

    # Pure-JAX/numpy reference using the same bf16 rounding as the kernel path
    x_np = np.asarray(x, np.float32)
    W_np = np.asarray(W, np.float32)
    b_np = np.asarray(bias, np.float32)
    A_bf = np.asarray(A_scaled.astype(jnp.bfloat16).astype(jnp.float32))
    h_np = x_np @ W_np
    h_bf = np.asarray(jnp.asarray(h_np).astype(jnp.bfloat16).astype(jnp.float32))
    z_ref = A_bf @ h_bf + b_np
    z_bf = np.asarray(jnp.asarray(z_ref).astype(jnp.bfloat16).astype(jnp.float32))
    adj_ref = z_bf @ z_bf.T

    np.testing.assert_allclose(np.asarray(z), z_ref, rtol=2e-2, atol=2e-2)
    np.testing.assert_allclose(np.asarray(adj_rec), adj_ref, rtol=2e-2, atol=5e-2)

    print("KERNEL_OK")
</pallas_src>

<mosaic_0001>
module attributes {stable_mosaic.version = 11 : i64} {
  func.func @h_kernel(%arg0: i32, %arg1: memref<128x128xf32, #tpu.memory_space<vmem>>, %arg2: memref<128x128xf32, #tpu.memory_space<vmem>>, %arg3: memref<128x128xbf16, #tpu.memory_space<vmem>>) attributes {dimension_semantics = [#tpu.dimension_semantics<parallel>], iteration_bounds = array<i64: 5>, scalar_prefetch = 0 : i64, scratch_operands = 0 : i64, tpu.core_type = #tpu.core_type<tc>, window_params = [{transform_indices = @transform_0, window_bounds = array<i64: 128, 128>}, {pipeline_mode = #tpu.pipeline_mode<synchronous>, transform_indices = @transform_1, window_bounds = array<i64: 128, 128>}, {transform_indices = @transform_2, window_bounds = array<i64: 128, 128>}]} {
    %c0 = arith.constant 0 : index
    %c0_0 = arith.constant 0 : index
    %0 = vector.load %arg1[%c0, %c0_0] : memref<128x128xf32, #tpu.memory_space<vmem>>, vector<128x128xf32>
    %c0_1 = arith.constant 0 : index
    %c0_2 = arith.constant 0 : index
    %1 = vector.load %arg2[%c0_1, %c0_2] : memref<128x128xf32, #tpu.memory_space<vmem>>, vector<128x128xf32>
    %cst = arith.constant dense<0.000000e+00> : vector<128x128xf32>
    %2 = tpu.matmul %0, %1, %cst {dimension_numbers = #tpu.dot_dimension_numbers<[1], [0], [0], [1], [0, 0, 1, 1], [], []>} : vector<128x128xf32>, vector<128x128xf32>, vector<128x128xf32> -> vector<128x128xf32>
    %3 = arith.truncf %2 : vector<128x128xf32> to vector<128x128xbf16>
    %c0_3 = arith.constant 0 : index
    %c0_4 = arith.constant 0 : index
    %4 = vector.load %arg3[%c0_3, %c0_4] : memref<128x128xbf16, #tpu.memory_space<vmem>>, vector<128x128xbf16>
    tpu.vector_store %arg3[%c0_3, %c0_4], %3 {strides = array<i32>} : memref<128x128xbf16, #tpu.memory_space<vmem>>, vector<128x128xbf16>,
    return
  }
  func.func @transform_0(%arg0: i32) -> (i32, i32) {
    %c0_i32 = arith.constant 0 : i32
    %c0_i32_0 = arith.constant 0 : i32
    return %arg0, %c0_i32 : i32, i32
  }
  func.func @transform_1(%arg0: i32) -> (i32, i32) {
    %c0_i32 = arith.constant 0 : i32
    %c0_i32_0 = arith.constant 0 : i32
    %c0_i32_1 = arith.constant 0 : i32
    return %c0_i32, %c0_i32_0 : i32, i32
  }
  func.func @transform_2(%arg0: i32) -> (i32, i32) {
    %c0_i32 = arith.constant 0 : i32
    %c0_i32_0 = arith.constant 0 : i32
    return %arg0, %c0_i32 : i32, i32
  }
}

</mosaic_0001>

<llo_original>
// kernel: tpu_custom_call.1
$region0: #{tpu_custom_call.1}
  #allocation0 [shape = 'u32[]', space=smem, size = 0x4, offset = 0x4, fixed_abs, tag = 'smem constant byte address 0x4 - core index']
  #allocation1 [shape = 'u32[144,128]{1,0:T(1,128)}', space=vmem, size = 0x12000, scoped, tag = 'internal scratch']
  %s0 = inlined_call_operand.hbm [shape: f32[640,128], index: 0, kind: input, shape index: {}]
  %s1 = inlined_call_operand.hbm [shape: f32[128,128], index: 1, kind: input, shape index: {}]
  %s2 = inlined_call_operand.hbm [shape: bf16[640,128], index: 2, kind: output, shape index: {}]
  %s3 = sld [smem:[#allocation0]]
  $region49: #{tpu_custom_call.1} parent=0
    _
  %s5 = ssub.s32 1, %s3
  %s6 = scalar_select 0, %s5, %s3
  $region1: #{tpu_custom_call.1} parent=0
    #allocation2 [shape = 'u8[131072]{0}', space=vmem, size = 0x20000, scoped, tag = 'input window, operand 0']
    #allocation3 [shape = 's32[2]{0}', space=sflag, size = 0x8, scoped, tag = 'scoped memory for tpu_custom_call.1']
    #allocation4 [shape = 's32[2]{0}', space=sflag, size = 0x8, scoped, tag = 'scoped memory for tpu_custom_call.1']
    #allocation5 [shape = 'u8[65536]{0}', space=vmem, size = 0x10000, scoped, tag = 'input window, operand 1, single buffered']
    #allocation6 [shape = 's32[1]{0}', space=sflag, size = 0x4, scoped, tag = 'scoped memory for tpu_custom_call.1']
    #allocation7 [shape = 'u8[65536]{0}', space=vmem, size = 0x10000, scoped, tag = 'output window, operand 0']
    %7 = vsyncpa [#allocation3], 0
    %s8 = scalar_lea.sflag [#allocation3], 1
    %9 = vsyncpa %s8, 0
    %10 = vsyncpa [#allocation6], 0
    %11 = vsyncpa [#allocation4], 0
    %s12 = scalar_lea.sflag [#allocation4], 1
    %13 = vsyncpa %s12, 0
    loop: start=0, step=1, limit=7
    $region2: #{tpu_custom_call.1} parent=1 // loop_pre_header
      _
    $region3: #{tpu_custom_call.1} parent=1 // loop_header
      %s15 = sphi 0, %s19
      %p16 = scmp.ge.s32.totalorder %s15, 7
      %s25 = sphi 0, %s27
      %s28 = sphi 0, %s25
      %s29 = sphi 0, %s28
      %s45 = sphi 0, %s29
      %s49 = sphi 0, %s49
      %s51 = sphi 0, %s49
      %s52 = sphi 0, %s51
      %s66 = sphi 0, %s52
      %s72 = sphi 0, %s74
      %s75 = sphi 0, %s72
      %s76 = sphi 0, %s75
      %s92 = sphi 0, %s76
    $region4: #{tpu_custom_call.1} parent=1 // loop_header_branch
      %18 = sbr.rel (%p16) target = $region8
    $region5: #{tpu_custom_call.1} parent=1 // loop_body
      %s20 = ssub.s32 %s15, 1
      %s21 = ssub.s32 %s15, 2
      %s22 = sadd.s32 %s15, 1
      %s23 = ssub.s32 %s15, %s22
      %p24 = scmp.eq.s32.totalorder %s23, 0
      %s26 = sadd.s32 %s25, 1
      %s27 = scalar_select %p24, %s25, %s26
      %p30 = pneg %p24
      %p31 = scmp.eq.s32.totalorder %s15, 4
      %p32 = por %p30, %p31
      %p33 = scmp.ne.s32.totalorder %s25, %s28
      %p34 = scmp.eq.s32.totalorder %s15, 0
      %p35 = por %p33, %p34
      %p36 = scmp.ne.s32.totalorder %s25, %s28
      %p37 = scmp.eq.s32.totalorder %s20, 4
      %p38 = por %p36, %p37
      %p39 = scmp.ne.s32.totalorder %s28, %s29
      %p40 = scmp.eq.s32.totalorder %s20, 0
      %p41 = por %p39, %p40
      %p42 = scmp.ne.s32.totalorder %s28, %s29
      %p43 = scmp.eq.s32.totalorder %s21, 4
      %p44 = por %p42, %p43
      %p46 = scmp.ne.s32.totalorder %s29, %s45
      %p47 = scmp.eq.s32.totalorder %s21, 0
      %p48 = por %p46, %p47
      %s50 = sadd.s32 %s49, 1
      %p53 = scmp.eq.s32.totalorder %s15, 4
      %p54 = scmp.ne.s32.totalorder %s49, %s51
      %p55 = scmp.eq.s32.totalorder %s15, 0
      %p56 = por %p54, %p55
      %p57 = scmp.ne.s32.totalorder %s49, %s51
      %p58 = scmp.eq.s32.totalorder %s20, 4
      %p59 = por %p57, %p58
      %p60 = scmp.ne.s32.totalorder %s51, %s52
      %p61 = scmp.eq.s32.totalorder %s20, 0
      %p62 = por %p60, %p61
      %p63 = scmp.ne.s32.totalorder %s51, %s52
      %p64 = scmp.eq.s32.totalorder %s21, 4
      %p65 = por %p63, %p64
      %p67 = scmp.ne.s32.totalorder %s52, %s66
      %p68 = scmp.eq.s32.totalorder %s21, 0
      %p69 = por %p67, %p68
      %s70 = ssub.s32 %s15, %s22
      %p71 = scmp.eq.s32.totalorder %s70, 0
      %s73 = sadd.s32 %s72, 1
      %s74 = scalar_select %p71, %s72, %s73
      %p77 = pneg %p71
      %p78 = scmp.eq.s32.totalorder %s15, 4
      %p79 = por %p77, %p78
      %p80 = scmp.ne.s32.totalorder %s72, %s75
      %p81 = scmp.eq.s32.totalorder %s15, 0
      %p82 = por %p80, %p81
      %p83 = scmp.ne.s32.totalorder %s72, %s75
      %p84 = scmp.eq.s32.totalorder %s20, 4
      %p85 = por %p83, %p84
      %p86 = scmp.ne.s32.totalorder %s75, %s76
      %p87 = scmp.eq.s32.totalorder %s20, 0
      %p88 = por %p86, %p87
      %p89 = scmp.ne.s32.totalorder %s75, %s76
      %p90 = scmp.eq.s32.totalorder %s21, 4
      %p91 = por %p89, %p90
      %p93 = scmp.ne.s32.totalorder %s76, %s92
      %p94 = scmp.eq.s32.totalorder %s21, 0
      %p95 = por %p93, %p94
      %p96 = scmp.le.s32.totalorder 1, %s15
      %p97 = scmp.lt.s32.totalorder %s15, 6
      %p98 = pnand %p96, %p97
      %p99 = pneg %p98
      // Predicated region
      $region9: #{tpu_custom_call.1} parent=5 // pred_check
        _
      $region10: #{tpu_custom_call.1} parent=5 // pred_check_branch
        %101 = sbr.rel (%p98) target = $region12
      $region11: #{tpu_custom_call.1} parent=5 // pred_region
        %s102 = ssub.s32 %s15, 1
        // Predicated region
        $region13: #{tpu_custom_call.1} parent=11 // pred_check
          %p103 = pneg %p62
        $region14: #{tpu_custom_call.1} parent=11 // pred_check_branch
          %105 = sbr.rel (%p103) target = $region16
        $region15: #{tpu_custom_call.1} parent=11 // pred_region
          %s107 = ssub.s32 2048, 2048
          %108 = vsyncadd [#allocation6], %s107
          %s109 = sshll.u32 [#allocation5], 4
          %s110 = int_to_ptr.vmem [resolvable:$true] %s109
          %115 = dma.hbm_to_vmem [thread:$0]  %s1, 2048, %s110, [#allocation6], 128, 128, 8
        $region16: #{tpu_custom_call.1} parent=11 // pred_fallthru
          _
      $region12: #{tpu_custom_call.1} parent=5 // pred_fallthru
        _
      %p116 = scmp.lt.s32.totalorder %s15, 5
      // Predicated region
      $region17: #{tpu_custom_call.1} parent=5 // pred_check
        %p117 = pneg %p116
      $region18: #{tpu_custom_call.1} parent=5 // pred_check_branch
        %119 = sbr.rel (%p117) target = $region20
      $region19: #{tpu_custom_call.1} parent=5 // pred_region
        // Predicated region
        $region21: #{tpu_custom_call.1} parent=19 // pred_check
          %p120 = pneg %p35
        $region22: #{tpu_custom_call.1} parent=19 // pred_check_branch
          %122 = sbr.rel (%p120) target = $region24
        $region23: #{tpu_custom_call.1} parent=19 // pred_region
          %s123 = sand.u32 %s25, 1
          %s124 = scalar_lea.sflag [#allocation3], %s123
          %s125 = sand.u32 %s25, 1
          %s126 = smul.addr %s125, 128
          %s127 = scalar_lea.vmem [#allocation2], %s126
          %s128 = smul.u32 16, %s15
          %s130 = ssub.s32 2048, 2048
          %131 = vsyncadd %s124, %s130
          %s132 = smul.addr %s128, 128
          %s133 = scalar_lea.hbm %s0, %s132
          %s134 = sshll.u32 %s127, 4
          %s135 = int_to_ptr.vmem [resolvable:$true] %s134
          %140 = dma.hbm_to_vmem [thread:$0]  %s133, 2048, %s135, %s124, 128, 128, 8
        $region24: #{tpu_custom_call.1} parent=19 // pred_fallthru
          _
      $region20: #{tpu_custom_call.1} parent=5 // pred_fallthru
        _
      %p141 = scmp.le.s32.totalorder 1, %s15
      %p142 = scmp.lt.s32.totalorder %s15, 6
      %p143 = pnand %p141, %p142
      %p144 = pneg %p143
      // Predicated region
      $region25: #{tpu_custom_call.1} parent=5 // pred_check
        _
      $region26: #{tpu_custom_call.1} parent=5 // pred_check_branch
        %146 = sbr.rel (%p143) target = $region28
      $region27: #{tpu_custom_call.1} parent=5 // pred_region
        %s147 = ssub.s32 %s15, 1
        %s148 = sand.u32 %s28, 1
        %s149 = scalar_lea.sflag [#allocation3], %s148
        %s150 = sand.u32 %s28, 1
        %s151 = smul.addr %s150, 128
        %s152 = scalar_lea.vmem [#allocation2], %s151
        // Predicated region
        $region29: #{tpu_custom_call.1} parent=27 // pred_check
          %p153 = pneg %p41
        $region30: #{tpu_custom_call.1} parent=27 // pred_check_branch
          %155 = sbr.rel (%p153) target = $region32
        $region31: #{tpu_custom_call.1} parent=27 // pred_region
          %156 = dma.done %s149, 2048
        $region32: #{tpu_custom_call.1} parent=27 // pred_fallthru
          _
        // Predicated region
        $region33: #{tpu_custom_call.1} parent=27 // pred_check
          %p157 = pneg %p62
        $region34: #{tpu_custom_call.1} parent=27 // pred_check_branch
          %159 = sbr.rel (%p157) target = $region36
        $region35: #{tpu_custom_call.1} parent=27 // pred_region
          %160 = dma.done [#allocation6], 2048
        $region36: #{tpu_custom_call.1} parent=27 // pred_fallthru
          _
        %s161 = sand.u32 %s28, 1
        %s162 = scalar_lea.sflag [#allocation3], %s161
        %s163 = sand.u32 %s28, 1
        %s164 = smul.addr %s163, 128
        %s165 = scalar_lea.vmem [#allocation2], %s164
        %p166 = pneg %p41
        %p167 = pneg %p38
        %p168 = pneg %p62
        %p169 = pneg %p59
        %p170 = pneg %p88
        %p171 = pneg %p85
        %s172 = sand.u32 %s75, 1
        %s173 = scalar_lea.sflag [#allocation4], %s172
        %s174 = sand.u32 %s75, 1
        %s175 = smul.addr %s174, 64
        %s176 = scalar_lea.vmem [#allocation7], %s175
        %s177 = smul.u32 16, %s20
        %s178 = smul.u32 16, %s20
        %v179 = vld [vmem:[%s152] sm:$0xff]
        %v180 = vld [vmem:[%s152 + $0x8] sm:$0xff]
        %v181 = vld [vmem:[%s152 + $0x10] sm:$0xff]
        %v182 = vld [vmem:[%s152 + $0x18] sm:$0xff]
        %v183 = vld [vmem:[%s152 + $0x20] sm:$0xff]
        %v184 = vld [vmem:[%s152 + $0x28] sm:$0xff]
        %v185 = vld [vmem:[%s152 + $0x30] sm:$0xff]
        %v186 = vld [vmem:[%s152 + $0x38] sm:$0xff]
        %v187 = vld [vmem:[%s152 + $0x40] sm:$0xff]
        %v188 = vld [vmem:[%s152 + $0x48] sm:$0xff]
        %v189 = vld [vmem:[%s152 + $0x50] sm:$0xff]
        %v190 = vld [vmem:[%s152 + $0x58] sm:$0xff]
        %v191 = vld [vmem:[%s152 + $0x60] sm:$0xff]
        %v192 = vld [vmem:[%s152 + $0x68] sm:$0xff]
        %v193 = vld [vmem:[%s152 + $0x70] sm:$0xff]
        %v194 = vld [vmem:[%s152 + $0x78] sm:$0xff]
        %v195 = vld [vmem:[#allocation5] sm:$0xff]
        %v196 = vld [vmem:[#allocation5 + $0x8] sm:$0xff]
        %v197 = vld [vmem:[#allocation5 + $0x10] sm:$0xff]
        %v198 = vld [vmem:[#allocation5 + $0x18] sm:$0xff]
        %v199 = vld [vmem:[#allocation5 + $0x20] sm:$0xff]
        %v200 = vld [vmem:[#allocation5 + $0x28] sm:$0xff]
        %v201 = vld [vmem:[#allocation5 + $0x30] sm:$0xff]
        %v202 = vld [vmem:[#allocation5 + $0x38] sm:$0xff]
        %v203 = vld [vmem:[#allocation5 + $0x40] sm:$0xff]
        %v204 = vld [vmem:[#allocation5 + $0x48] sm:$0xff]
        %v205 = vld [vmem:[#allocation5 + $0x50] sm:$0xff]
        %v206 = vld [vmem:[#allocation5 + $0x58] sm:$0xff]
        %v207 = vld [vmem:[#allocation5 + $0x60] sm:$0xff]
        %v208 = vld [vmem:[#allocation5 + $0x68] sm:$0xff]
        %v209 = vld [vmem:[#allocation5 + $0x70] sm:$0xff]
        %v210 = vld [vmem:[#allocation5 + $0x78] sm:$0xff]
        %211 = vmatprep.subr.mxu0 0.0
        %212 = vmatpush1.msra.mxu0 %v210
        %213 = vmatprep.subr.mxu0 0.0
        %214 = vmatpush1.msra.mxu0 %v209
        %215 = vmatprep.subr.mxu0 0.0
        %216 = vmatpush1.msra.mxu0 %v208
        %217 = vmatprep.subr.mxu0 0.0
        %218 = vmatpush1.msra.mxu0 %v207
        %219 = vmatprep.subr.mxu0 0.0
        %220 = vmatpush1.msra.mxu0 %v206
        %221 = vmatprep.subr.mxu0 0.0
        %222 = vmatpush1.msra.mxu0 %v205
        %223 = vmatprep.subr.mxu0 0.0
        %224 = vmatpush1.msra.mxu0 %v204
        %225 = vmatprep.subr.mxu0 0.0
        %226 = vmatpush1.msra.mxu0 %v203
        %227 = vmatprep.subr.mxu0 0.0
        %228 = vmatpush1.msra.mxu0 %v202
        %229 = vmatprep.subr.mxu0 0.0
        %230 = vmatpush1.msra.mxu0 %v201
        %231 = vmatprep.subr.mxu0 0.0
        %232 = vmatpush1.msra.mxu0 %v200
        %233 = vmatprep.subr.mxu0 0.0
        %234 = vmatpush1.msra.mxu0 %v199
        %235 = vmatprep.subr.mxu0 0.0
        %236 = vmatpush1.msra.mxu0 %v198
        %237 = vmatprep.subr.mxu0 0.0
        %238 = vmatpush1.msra.mxu0 %v197
        %239 = vmatprep.subr.mxu0 0.0
        %240 = vmatpush1.msra.mxu0 %v196
        %241 = vmatprep.subr.mxu0 0.0
        %242 = vmatpush1.msra.mxu0 %v195
        %243 = vmatprep.subr.mxu0 0.0
        %244 = vmatpush2.msra.mxu0 0.0
        %245 = vmatprep.subr.mxu0 0.0
        %246 = vmatpush2.msra.mxu0 0.0
        %247 = vmatprep.subr.mxu0 0.0
        %248 = vmatpush2.msra.mxu0 0.0
        %249 = vmatprep.subr.mxu0 0.0
        %250 = vmatpush2.msra.mxu0 0.0
        %251 = vmatprep.subr.mxu0 0.0
        %252 = vmatpush2.msra.mxu0 0.0
        %253 = vmatprep.subr.mxu0 0.0
        %254 = vmatpush2.msra.mxu0 0.0
        %255 = vmatprep.subr.mxu0 0.0
        %256 = vmatpush2.msra.mxu0 0.0
        %257 = vmatprep.subr.mxu0 0.0
        %258 = vmatpush2.msra.mxu0 0.0
        %259 = vmatprep.subr.mxu0 0.0
        %260 = vmatpush2.msra.mxu0 0.0
        %261 = vmatprep.subr.mxu0 0.0
        %262 = vmatpush2.msra.mxu0 0.0
        %263 = vmatprep.subr.mxu0 0.0
        %264 = vmatpush2.msra.mxu0 0.0
        %265 = vmatprep.subr.mxu0 0.0
        %266 = vmatpush2.msra.mxu0 0.0
        %267 = vmatprep.subr.mxu0 0.0
        %268 = vmatpush2.msra.mxu0 0.0
        %269 = vmatprep.subr.mxu0 0.0
        %270 = vmatpush2.msra.mxu0 0.0
        %271 = vmatprep.subr.mxu0 0.0
        %272 = vmatpush2.msra.mxu0 0.0
        %273 = vmatprep.subr.mxu0 0.0
        %274 = vmatpush2.msra.mxu0 0.0
        %275 = vmatprep.mubr.f32.mxu0 0.0
        %276 = vmatmul.mubr.f32.gmra.mxu0 %v179
        %v277 = vpop.f32.mrf.mxu0
        %v278 = vadd.f32 0.0, %v277
        %v279 = vpop.f32.mrf.mxu0
        %280 = vmatprep.mubr.f32.mxu0 0.0
        %281 = vmatmul.mubr.f32.gmra.mxu0 %v180
        %v282 = vpop.f32.mrf.mxu0
        %v283 = vadd.f32 0.0, %v282
        %v284 = vpop.f32.mrf.mxu0
        %285 = vmatprep.mubr.f32.mxu0 0.0
        %286 = vmatmul.mubr.f32.gmra.mxu0 %v181
        %v287 = vpop.f32.mrf.mxu0
        %v288 = vadd.f32 0.0, %v287
        %v289 = vpop.f32.mrf.mxu0
        %290 = vmatprep.mubr.f32.mxu0 0.0
        %291 = vmatmul.mubr.f32.gmra.mxu0 %v182
        %v292 = vpop.f32.mrf.mxu0
        %v293 = vadd.f32 0.0, %v292
        %v294 = vpop.f32.mrf.mxu0
        %295 = vmatprep.mubr.f32.mxu0 0.0
        %296 = vmatmul.mubr.f32.gmra.mxu0 %v183
        %v297 = vpop.f32.mrf.mxu0
        %v298 = vadd.f32 0.0, %v297
        %v299 = vpop.f32.mrf.mxu0
        %300 = vmatprep.mubr.f32.mxu0 0.0
        %301 = vmatmul.mubr.f32.gmra.mxu0 %v184
        %v302 = vpop.f32.mrf.mxu0
        %v303 = vadd.f32 0.0, %v302
        %v304 = vpop.f32.mrf.mxu0
        %305 = vmatprep.mubr.f32.mxu0 0.0
        %306 = vmatmul.mubr.f32.gmra.mxu0 %v185
        %v307 = vpop.f32.mrf.mxu0
        %v308 = vadd.f32 0.0, %v307
        %v309 = vpop.f32.mrf.mxu0
        %310 = vmatprep.mubr.f32.mxu0 0.0
        %311 = vmatmul.mubr.f32.gmra.mxu0 %v186
        %v312 = vpop.f32.mrf.mxu0
        %v313 = vadd.f32 0.0, %v312
        %v314 = vpop.f32.mrf.mxu0
        %315 = vmatprep.mubr.f32.mxu0 0.0
        %316 = vmatmul.mubr.f32.gmra.mxu0 %v187
        %v317 = vpop.f32.mrf.mxu0
        %v318 = vadd.f32 0.0, %v317
        %v319 = vpop.f32.mrf.mxu0
        %320 = vmatprep.mubr.f32.mxu0 0.0
        %321 = vmatmul.mubr.f32.gmra.mxu0 %v188
        %v322 = vpop.f32.mrf.mxu0
        %v323 = vadd.f32 0.0, %v322
        %v324 = vpop.f32.mrf.mxu0
        %325 = vmatprep.mubr.f32.mxu0 0.0
        %326 = vmatmul.mubr.f32.gmra.mxu0 %v189
        %v327 = vpop.f32.mrf.mxu0
        %v328 = vadd.f32 0.0, %v327
        %v329 = vpop.f32.mrf.mxu0
        %330 = vmatprep.mubr.f32.mxu0 0.0
        %331 = vmatmul.mubr.f32.gmra.mxu0 %v190
        %v332 = vpop.f32.mrf.mxu0
        %v333 = vadd.f32 0.0, %v332
        %v334 = vpop.f32.mrf.mxu0
        %335 = vmatprep.mubr.f32.mxu0 0.0
        %336 = vmatmul.mubr.f32.gmra.mxu0 %v191
        %v337 = vpop.f32.mrf.mxu0
        %v338 = vadd.f32 0.0, %v337
        %v339 = vpop.f32.mrf.mxu0
        %340 = vmatprep.mubr.f32.mxu0 0.0
        %341 = vmatmul.mubr.f32.gmra.mxu0 %v192
        %v342 = vpop.f32.mrf.mxu0
        %v343 = vadd.f32 0.0, %v342
        %v344 = vpop.f32.mrf.mxu0
        %345 = vmatprep.mubr.f32.mxu0 0.0
        %346 = vmatmul.mubr.f32.gmra.mxu0 %v193
        %v347 = vpop.f32.mrf.mxu0
        %v348 = vadd.f32 0.0, %v347
        %v349 = vpop.f32.mrf.mxu0
        %350 = vmatprep.mubr.f32.mxu0 0.0
        %351 = vmatmul.mubr.f32.gmra.mxu0 %v194
        %v352 = vpop.f32.mrf.mxu0
        %v353 = vadd.f32 0.0, %v352
        %v354 = vpop.f32.mrf.mxu0
        %355 = vdwg.mxu0
        %v356 = vpack.c.bf16 %v283, %v278
        %v357 = vpack.c.bf16 %v293, %v288
        %v358 = vpack.c.bf16 %v303, %v298
        %v359 = vpack.c.bf16 %v313, %v308
        %v360 = vpack.c.bf16 %v323, %v318
        %v361 = vpack.c.bf16 %v333, %v328
        %v362 = vpack.c.bf16 %v343, %v338
        %v363 = vpack.c.bf16 %v353, %v348
        %v372 = vunpack.c.l.b16 %v356
        %v373 = vunpack.c.h.b16 %v356
        %v374 = vunpack.c.l.b16 %v357
        %v375 = vunpack.c.h.b16 %v357
        %v376 = vunpack.c.l.b16 %v358
        %v377 = vunpack.c.h.b16 %v358
        %v378 = vunpack.c.l.b16 %v359
        %v379 = vunpack.c.h.b16 %v359
        %v380 = vunpack.c.l.b16 %v360
        %v381 = vunpack.c.h.b16 %v360
        %v382 = vunpack.c.l.b16 %v361
        %v383 = vunpack.c.h.b16 %v361
        %v384 = vunpack.c.l.b16 %v362
        %v385 = vunpack.c.h.b16 %v362
        %v386 = vunpack.c.l.b16 %v363
        %v387 = vunpack.c.h.b16 %v363
        %v388 = vpack.c.b16 %v372, %v372
        %v389 = vpack.c.b16 %v373, %v373
        %v390 = vpack.c.b16 %v374, %v374
        %v391 = vpack.c.b16 %v375, %v375
        %v392 = vpack.c.b16 %v376, %v376
        %v393 = vpack.c.b16 %v377, %v377
        %v394 = vpack.c.b16 %v378, %v378
        %v395 = vpack.c.b16 %v379, %v379
        %v396 = vpack.c.b16 %v380, %v380
        %v397 = vpack.c.b16 %v381, %v381
        %v398 = vpack.c.b16 %v382, %v382
        %v399 = vpack.c.b16 %v383, %v383
        %v400 = vpack.c.b16 %v384, %v384
        %v401 = vpack.c.b16 %v385, %v385
        %v402 = vpack.c.b16 %v386, %v386
        %v403 = vpack.c.b16 %v387, %v387
        %420 = vst [vmem:[%s176] sm:$0xf] %v388
        %421 = vst [vmem:[%s176 + $0x4] sm:$0xf] %v389
        %422 = vst [vmem:[%s176 + $0x8] sm:$0xf] %v390
        %423 = vst [vmem:[%s176 + $0xc] sm:$0xf] %v391
        %424 = vst [vmem:[%s176 + $0x10] sm:$0xf] %v392
        %425 = vst [vmem:[%s176 + $0x14] sm:$0xf] %v393
        %426 = vst [vmem:[%s176 + $0x18] sm:$0xf] %v394
        %427 = vst [vmem:[%s176 + $0x1c] sm:$0xf] %v395
        %428 = vst [vmem:[%s176 + $0x20] sm:$0xf] %v396
        %429 = vst [vmem:[%s176 + $0x24] sm:$0xf] %v397
        %430 = vst [vmem:[%s176 + $0x28] sm:$0xf] %v398
        %431 = vst [vmem:[%s176 + $0x2c] sm:$0xf] %v399
        %432 = vst [vmem:[%s176 + $0x30] sm:$0xf] %v400
        %433 = vst [vmem:[%s176 + $0x34] sm:$0xf] %v401
        %434 = vst [vmem:[%s176 + $0x38] sm:$0xf] %v402
        %435 = vst [vmem:[%s176 + $0x3c] sm:$0xf] %v403
        %s436 = sand.u32 %s75, 1
        %s437 = scalar_lea.sflag [#allocation4], %s436
        %s438 = sand.u32 %s75, 1
        %s439 = smul.addr %s438, 64
        %s440 = scalar_lea.vmem [#allocation7], %s439
        // Predicated region
        $region37: #{tpu_custom_call.1} parent=27 // pred_check
          %p441 = pneg %p85
        $region38: #{tpu_custom_call.1} parent=27 // pred_check_branch
          %443 = sbr.rel (%p441) target = $region40
        $region39: #{tpu_custom_call.1} parent=27 // pred_region
          %s444 = smul.u32 16, %s20
          %s446 = ssub.s32 1024, 1024
          %447 = vsyncadd %s437, %s446
          %s448 = smul.addr %s444, 64
          %s449 = scalar_lea.hbm %s2, %s448
          %s450 = sshll.u32 %s440, 4
          %s451 = int_to_ptr.vmem [resolvable:$true] %s450
          %456 = dma.vmem_to_hbm [thread:$0]  %s451, 1024, %s449, %s437, 64, 64, 4
        $region40: #{tpu_custom_call.1} parent=27 // pred_fallthru
          _
      $region28: #{tpu_custom_call.1} parent=5 // pred_fallthru
        _
      %p457 = scmp.le.s32.totalorder 2, %s15
      // Predicated region
      $region41: #{tpu_custom_call.1} parent=5 // pred_check
        %p458 = pneg %p457
      $region42: #{tpu_custom_call.1} parent=5 // pred_check_branch
        %460 = sbr.rel (%p458) target = $region44
      $region43: #{tpu_custom_call.1} parent=5 // pred_region
        %s461 = ssub.s32 %s15, 2
        // Predicated region
        $region45: #{tpu_custom_call.1} parent=43 // pred_check
          %p462 = pneg %p91
        $region46: #{tpu_custom_call.1} parent=43 // pred_check_branch
          %464 = sbr.rel (%p462) target = $region48
        $region47: #{tpu_custom_call.1} parent=43 // pred_region
          %s465 = sand.u32 %s76, 1
          %s466 = scalar_lea.sflag [#allocation4], %s465
          %s467 = sand.u32 %s76, 1
          %s468 = smul.addr %s467, 64
          %s469 = scalar_lea.vmem [#allocation7], %s468
          %470 = dma.done %s466, 1024
        $region48: #{tpu_custom_call.1} parent=43 // pred_fallthru
          _
      $region44: #{tpu_custom_call.1} parent=5 // pred_fallthru
        _
    $region6: #{tpu_custom_call.1} parent=1 // loop_footer
      %s19 = sadd.s32 1, %s15
    $region7: #{tpu_custom_call.1} parent=1 // loop_footer_branch
      %14 = sbr.rel target = $region3
    $region8: #{tpu_custom_call.1} parent=1 // loop_exit
      _
    %471 = vsyncpa [#allocation3], 1
    %s472 = scalar_lea.sflag [#allocation3], 1
    %473 = vsyncpa %s472, 1
    %474 = vsyncpa [#allocation6], 1
    %475 = vsyncpa [#allocation4], 1
    %s476 = scalar_lea.sflag [#allocation4], 1
    %477 = vsyncpa %s476, 1

</llo_original>
